<compile_context>
chip_gen: v7x
topology: tpu7x:2x2x1
jax: 0.10.0
libtpu: 0.0.40
codegen_flags: <defaults>
</compile_context>

<pallas_src>
import jax
import jax.numpy as jnp
from jax.experimental import pallas as pl
from jax.experimental.pallas import tpu as pltpu


def mlp_kernel(xT_ref, w1_ref, b1_ref, w2_ref, b2_ref, w3_ref, b3_ref, oT_ref):
    # Linear(input_dim -> hidden) + ReLU, transposed: (hid, in) @ (in, TB)
    h = jnp.dot(w1_ref[...], xT_ref[...], preferred_element_type=jnp.float32)
    h = jnp.maximum(h + b1_ref[...], 0.0)
    # Linear(hidden -> hidden) + ReLU
    h = jnp.dot(w2_ref[...], h, preferred_element_type=jnp.float32)
    h = jnp.maximum(h + b2_ref[...], 0.0)
    # Linear(hidden -> out_dim) + Sigmoid: only out_dim rows, no padding lanes
    z = jnp.dot(w3_ref[...], h, preferred_element_type=jnp.float32)
    oT_ref[...] = jax.nn.sigmoid(z + b3_ref[...]).astype(oT_ref.dtype)


def _round_up(n, m):
    return ((n + m - 1) // m) * m


def behavioural_forward(x, params, *, tb_max=4096):
    """Pallas TPU implementation of Behavioural.forward(x).

    x: (B, input_dim) float32.  Returns (B, output_dim) float32.
    Weights are PyTorch-layout (out_features, in_features); biases (out, 1).
    """
    w1, b1, w2, b2, w3, b3 = params
    B, in_dim = x.shape
    hid = w1.shape[0]
    out_dim = w3.shape[0]

    # Batch on the lane axis: lane-dense x DMA and lane-dense output stores.
    xT = x.T  # (in_dim, B)

    # Batch tile (lane axis).  Block last dim must be a multiple of 128 or
    # equal to the full array dim.  Small problems get a single full tile;
    # larger ones get >= 2 tiles (keeps both v7x TensorCores busy via the
    # "parallel" grid axis) of at most tb_max lanes.  Even at tb_max=4096 the
    # double-buffered xT/out tiles are only ~(8+8)*TB*4B ~= 0.5 MiB, far under
    # every generation's scoped-VMEM default (16/32 MiB).
    if B <= 256:
        TB = B
    else:
        TB = min(tb_max, _round_up(pl.cdiv(B, 2), 128))
    grid = (pl.cdiv(B, TB),)

    def resident(arr):
        # Constant block index -> stays in VMEM across all grid steps.
        # (pipeline_mode=pl.Buffered(1) would save one redundant buffer per
        #  weight, but the residents total <10 KiB so it is skipped for
        #  maximum portability.)
        nd = arr.ndim
        return pl.BlockSpec(arr.shape, lambda i: (0,) * nd)

    in_specs = [
        pl.BlockSpec((in_dim, TB), lambda i: (0, i)),   # streamed xT tiles
        resident(w1), resident(b1),
        resident(w2), resident(b2),
        resident(w3), resident(b3),
    ]
    out_specs = pl.BlockSpec((out_dim, TB), lambda i: (0, i))

    fsize = 4  # float32
    flops = 2 * B * (in_dim * hid + hid * hid + hid * out_dim)
    bytes_accessed = fsize * (
        x.size + B * out_dim
        + w1.size + b1.size + w2.size + b2.size + w3.size + b3.size
    )

    outT = pl.pallas_call(
        mlp_kernel,
        grid=grid,
        out_shape=jax.ShapeDtypeStruct((out_dim, B), jnp.float32),
        in_specs=in_specs,
        out_specs=out_specs,
        compiler_params=pltpu.CompilerParams(
            # batch tiles are independent -> shard across TCs on v7x megacore
            dimension_semantics=("parallel",),
        ),
        cost_estimate=pl.CostEstimate(
            flops=flops,
            transcendentals=B * out_dim,   # one sigmoid exp per real output
            bytes_accessed=bytes_accessed,
        ),
    )(xT, w1, b1, w2, b2, w3, b3)

    return outT.T  # (B, out_dim)


def init_params(key, input_dim=5, hidden_dim=32, output_dim=2):
    """PyTorch-style (uniform +/- 1/sqrt(fan_in)) init.

    Weights are kept in PyTorch layout (out_features, in_features); biases are
    stored as (out_features, 1) so they broadcast over the lane (batch) axis
    inside the transposed kernel.
    """
    ks = jax.random.split(key, 6)

    def linear(kw, kb, fan_in, fan_out):
        bound = 1.0 / jnp.sqrt(jnp.float32(fan_in))
        w = jax.random.uniform(kw, (fan_out, fan_in), jnp.float32, -bound, bound)
        b = jax.random.uniform(kb, (fan_out, 1), jnp.float32, -bound, bound)
        return w, b

    w1, b1 = linear(ks[0], ks[1], input_dim, hidden_dim)
    w2, b2 = linear(ks[2], ks[3], hidden_dim, hidden_dim)
    w3, b3 = linear(ks[4], ks[5], hidden_dim, output_dim)
    return (w1, b1, w2, b2, w3, b3)


def behavioural_ref(x, params):
    w1, b1, w2, b2, w3, b3 = params
    hi = jax.lax.Precision.HIGHEST
    h = jnp.maximum(jnp.dot(x, w1.T, precision=hi) + b1.T, 0.0)
    h = jnp.maximum(jnp.dot(h, w2.T, precision=hi) + b2.T, 0.0)
    return jax.nn.sigmoid(jnp.dot(h, w3.T, precision=hi) + b3.T)


if __name__ == "__main__":
    key = jax.random.PRNGKey(0)
    k_x, k_p, k_x2 = jax.random.split(key, 3)

    batch, input_dim, hidden_dim, output_dim = 8, 5, 32, 2
    x = jax.random.normal(k_x, (batch, input_dim), jnp.float32)
    params = init_params(k_p, input_dim, hidden_dim, output_dim)

    out = jax.block_until_ready(behavioural_forward(x, params))
    ref = behavioural_ref(x, params)
    assert out.shape == (batch, output_dim)
    assert jnp.allclose(out, ref, atol=1e-5, rtol=1e-5), "mismatch vs reference (small batch)"

    # Larger batch exercises the pipelined multi-tile batch grid.
    big_batch = 2048
    x_big = jax.random.normal(k_x2, (big_batch, input_dim), jnp.float32)
    out_big = jax.block_until_ready(behavioural_forward(x_big, params))
    ref_big = behavioural_ref(x_big, params)
    assert out_big.shape == (big_batch, output_dim)
    assert jnp.allclose(out_big, ref_big, atol=1e-5, rtol=1e-5), "mismatch vs reference (big batch)"

    print("KERNEL_OK")
</pallas_src>

<mosaic_0001>
module attributes {stable_mosaic.version = 11 : i64} {
  func.func @mlp_kernel(%arg0: i32, %arg1: memref<5x8xf32, #tpu.memory_space<vmem>>, %arg2: memref<32x5xf32, #tpu.memory_space<vmem>>, %arg3: memref<32x1xf32, #tpu.memory_space<vmem>>, %arg4: memref<32x32xf32, #tpu.memory_space<vmem>>, %arg5: memref<32x1xf32, #tpu.memory_space<vmem>>, %arg6: memref<2x32xf32, #tpu.memory_space<vmem>>, %arg7: memref<2x1xf32, #tpu.memory_space<vmem>>, %arg8: memref<2x8xf32, #tpu.memory_space<vmem>>) attributes {dimension_semantics = [#tpu.dimension_semantics<parallel>], iteration_bounds = array<i64: 1>, scalar_prefetch = 0 : i64, scratch_operands = 0 : i64, tpu.core_type = #tpu.core_type<tc>, window_params = [{transform_indices = @transform_0, window_bounds = array<i64: 5, 8>}, {pipeline_mode = #tpu.pipeline_mode<synchronous>, transform_indices = @transform_1, window_bounds = array<i64: 32, 5>}, {pipeline_mode = #tpu.pipeline_mode<synchronous>, transform_indices = @transform_2, window_bounds = array<i64: 32, 1>}, {pipeline_mode = #tpu.pipeline_mode<synchronous>, transform_indices = @transform_3, window_bounds = array<i64: 32, 32>}, {pipeline_mode = #tpu.pipeline_mode<synchronous>, transform_indices = @transform_4, window_bounds = array<i64: 32, 1>}, {pipeline_mode = #tpu.pipeline_mode<synchronous>, transform_indices = @transform_5, window_bounds = array<i64: 2, 32>}, {pipeline_mode = #tpu.pipeline_mode<synchronous>, transform_indices = @transform_6, window_bounds = array<i64: 2, 1>}, {transform_indices = @transform_7, window_bounds = array<i64: 2, 8>}]} {
    %c0 = arith.constant 0 : index
    %c0_0 = arith.constant 0 : index
    %0 = vector.load %arg2[%c0, %c0_0] : memref<32x5xf32, #tpu.memory_space<vmem>>, vector<32x5xf32>
    %c0_1 = arith.constant 0 : index
    %c0_2 = arith.constant 0 : index
    %1 = vector.load %arg1[%c0_1, %c0_2] : memref<5x8xf32, #tpu.memory_space<vmem>>, vector<5x8xf32>
    %cst = arith.constant dense<0.000000e+00> : vector<32x8xf32>
    %2 = tpu.matmul %0, %1, %cst {dimension_numbers = #tpu.dot_dimension_numbers<[1], [0], [0], [1], [0, 0, 1, 1], [], []>} : vector<32x5xf32>, vector<5x8xf32>, vector<32x8xf32> -> vector<32x8xf32>
    %c0_3 = arith.constant 0 : index
    %c0_4 = arith.constant 0 : index
    %3 = vector.load %arg3[%c0_3, %c0_4] : memref<32x1xf32, #tpu.memory_space<vmem>>, vector<32x1xf32>
    %4 = vector.broadcast %3 : vector<32x1xf32> to vector<32x8xf32>
    %5 = arith.addf %2, %4 : vector<32x8xf32>
    %cst_5 = arith.constant 0.000000e+00 : f32
    %6 = vector.broadcast %cst_5 : f32 to vector<32x8xf32>
    %7 = arith.maximumf %5, %6 : vector<32x8xf32>
    %c0_6 = arith.constant 0 : index
    %c0_7 = arith.constant 0 : index
    %8 = vector.load %arg4[%c0_6, %c0_7] : memref<32x32xf32, #tpu.memory_space<vmem>>, vector<32x32xf32>
    %cst_8 = arith.constant dense<0.000000e+00> : vector<32x8xf32>
    %9 = tpu.matmul %8, %7, %cst_8 {dimension_numbers = #tpu.dot_dimension_numbers<[1], [0], [0], [1], [0, 0, 1, 1], [], []>} : vector<32x32xf32>, vector<32x8xf32>, vector<32x8xf32> -> vector<32x8xf32>
    %c0_9 = arith.constant 0 : index
    %c0_10 = arith.constant 0 : index
    %10 = vector.load %arg5[%c0_9, %c0_10] : memref<32x1xf32, #tpu.memory_space<vmem>>, vector<32x1xf32>
    %11 = vector.broadcast %10 : vector<32x1xf32> to vector<32x8xf32>
    %12 = arith.addf %9, %11 : vector<32x8xf32>
    %cst_11 = arith.constant 0.000000e+00 : f32
    %13 = vector.broadcast %cst_11 : f32 to vector<32x8xf32>
    %14 = arith.maximumf %12, %13 : vector<32x8xf32>
    %c0_12 = arith.constant 0 : index
    %c0_13 = arith.constant 0 : index
    %15 = vector.load %arg6[%c0_12, %c0_13] : memref<2x32xf32, #tpu.memory_space<vmem>>, vector<2x32xf32>
    %cst_14 = arith.constant dense<0.000000e+00> : vector<2x8xf32>
    %16 = tpu.matmul %15, %14, %cst_14 {dimension_numbers = #tpu.dot_dimension_numbers<[1], [0], [0], [1], [0, 0, 1, 1], [], []>} : vector<2x32xf32>, vector<32x8xf32>, vector<2x8xf32> -> vector<2x8xf32>
    %c0_15 = arith.constant 0 : index
    %c0_16 = arith.constant 0 : index
    %17 = vector.load %arg7[%c0_15, %c0_16] : memref<2x1xf32, #tpu.memory_space<vmem>>, vector<2x1xf32>
    %18 = vector.broadcast %17 : vector<2x1xf32> to vector<2x8xf32>
    %19 = arith.addf %16, %18 : vector<2x8xf32>
    %20 = arith.negf %19 : vector<2x8xf32>
    %21 = math.exp %20 : vector<2x8xf32>
    %cst_17 = arith.constant 1.000000e+00 : f32
    %22 = vector.broadcast %cst_17 : f32 to vector<2x8xf32>
    %23 = arith.addf %22, %21 : vector<2x8xf32>
    %24 = arith.divf %22, %23 : vector<2x8xf32>
    %c0_18 = arith.constant 0 : index
    %c0_19 = arith.constant 0 : index
    %25 = vector.load %arg8[%c0_18, %c0_19] : memref<2x8xf32, #tpu.memory_space<vmem>>, vector<2x8xf32>
    tpu.vector_store %arg8[%c0_18, %c0_19], %24 {strides = array<i32>} : memref<2x8xf32, #tpu.memory_space<vmem>>, vector<2x8xf32>,
    return
  }
  func.func @transform_0(%arg0: i32) -> (i32, i32) {
    %c0_i32 = arith.constant 0 : i32
    %c0_i32_0 = arith.constant 0 : i32
    return %c0_i32, %arg0 : i32, i32
  }
  func.func @transform_1(%arg0: i32) -> (i32, i32) {
    %c0_i32 = arith.constant 0 : i32
    %c0_i32_0 = arith.constant 0 : i32
    %c0_i32_1 = arith.constant 0 : i32
    return %c0_i32, %c0_i32_0 : i32, i32
  }
  func.func @transform_2(%arg0: i32) -> (i32, i32) {
    %c0_i32 = arith.constant 0 : i32
    %c0_i32_0 = arith.constant 0 : i32
    %c0_i32_1 = arith.constant 0 : i32
    return %c0_i32, %c0_i32_0 : i32, i32
  }
  func.func @transform_3(%arg0: i32) -> (i32, i32) {
    %c0_i32 = arith.constant 0 : i32
    %c0_i32_0 = arith.constant 0 : i32
    %c0_i32_1 = arith.constant 0 : i32
    return %c0_i32, %c0_i32_0 : i32, i32
  }
  func.func @transform_4(%arg0: i32) -> (i32, i32) {
    %c0_i32 = arith.constant 0 : i32
    %c0_i32_0 = arith.constant 0 : i32
    %c0_i32_1 = arith.constant 0 : i32
    return %c0_i32, %c0_i32_0 : i32, i32
  }
  func.func @transform_5(%arg0: i32) -> (i32, i32) {
    %c0_i32 = arith.constant 0 : i32
    %c0_i32_0 = arith.constant 0 : i32
    %c0_i32_1 = arith.constant 0 : i32
    return %c0_i32, %c0_i32_0 : i32, i32
  }
  func.func @transform_6(%arg0: i32) -> (i32, i32) {
    %c0_i32 = arith.constant 0 : i32
    %c0_i32_0 = arith.constant 0 : i32
    %c0_i32_1 = arith.constant 0 : i32
    return %c0_i32, %c0_i32_0 : i32, i32
  }
  func.func @transform_7(%arg0: i32) -> (i32, i32) {
    %c0_i32 = arith.constant 0 : i32
    %c0_i32_0 = arith.constant 0 : i32
    return %c0_i32, %arg0 : i32, i32
  }
}

</mosaic_0001>

<llo_original>
// kernel: tpu_custom_call.1
$region0: #{tpu_custom_call.1}
  #allocation0 [shape = 'u32[]', space=smem, size = 0x4, offset = 0x4, fixed_abs, tag = 'smem constant byte address 0x4 - core index']
  #allocation1 [shape = 'u32[144,128]{1,0:T(1,128)}', space=vmem, size = 0x12000, scoped, tag = 'internal scratch']
  %s0 = inlined_call_operand.vmem [shape: f32[5,8], index: 0, kind: input, shape index: {}]
  %s1 = inlined_call_operand.vmem [shape: f32[32,5], index: 1, kind: input, shape index: {}]
  %s2 = inlined_call_operand.vmem [shape: f32[32,1], index: 2, kind: input, shape index: {}]
  %s3 = inlined_call_operand.vmem [shape: f32[32,32], index: 3, kind: input, shape index: {}]
  %s4 = inlined_call_operand.vmem [shape: f32[32,1], index: 4, kind: input, shape index: {}]
  %s5 = inlined_call_operand.vmem [shape: f32[2,32], index: 5, kind: input, shape index: {}]
  %s6 = inlined_call_operand.vmem [shape: f32[2,1], index: 6, kind: input, shape index: {}]
  %s7 = inlined_call_operand.hbm [shape: f32[2,8], index: 7, kind: output, shape index: {}]
  %s8 = sld [smem:[#allocation0]]
  $region38: #{tpu_custom_call.1} parent=0
    _
  %s10 = ssub.s32 1, %s8
  %s11 = scalar_select 0, %s10, %s8
  $region1: #{tpu_custom_call.1} parent=0
    #allocation2 [shape = 'u8[1024]{0}', space=vmem, size = 0x400, scoped, tag = 'output window, operand 0, single buffered']
    #allocation3 [shape = 's32[1]{0}', space=sflag, size = 0x4, scoped, tag = 'scoped memory for tpu_custom_call.1']
    %12 = vsyncpa [#allocation3], 0
    // Predicated region
    $region2: #{tpu_custom_call.1} parent=1 // pred_check
      _
    $region3: #{tpu_custom_call.1} parent=1 // pred_check_branch
      %14 = sbr.rel (0) target = $region5
    $region4: #{tpu_custom_call.1} parent=1 // pred_region
      _
    $region5: #{tpu_custom_call.1} parent=1 // pred_fallthru
      _
    // Predicated region
    $region6: #{tpu_custom_call.1} parent=1 // pred_check
      _
    $region7: #{tpu_custom_call.1} parent=1 // pred_check_branch
      %16 = sbr.rel (0) target = $region9
    $region8: #{tpu_custom_call.1} parent=1 // pred_region
      _
    $region9: #{tpu_custom_call.1} parent=1 // pred_fallthru
      _
    // Predicated region
    $region10: #{tpu_custom_call.1} parent=1 // pred_check
      _
    $region11: #{tpu_custom_call.1} parent=1 // pred_check_branch
      %18 = sbr.rel (0) target = $region13
    $region12: #{tpu_custom_call.1} parent=1 // pred_region
      _
    $region13: #{tpu_custom_call.1} parent=1 // pred_fallthru
      _
    // Predicated region
    $region14: #{tpu_custom_call.1} parent=1 // pred_check
      _
    $region15: #{tpu_custom_call.1} parent=1 // pred_check_branch
      %20 = sbr.rel (0) target = $region17
    $region16: #{tpu_custom_call.1} parent=1 // pred_region
      _
    $region17: #{tpu_custom_call.1} parent=1 // pred_fallthru
      _
    // Predicated region
    $region18: #{tpu_custom_call.1} parent=1 // pred_check
      _
    $region19: #{tpu_custom_call.1} parent=1 // pred_check_branch
      %22 = sbr.rel (0) target = $region21
    $region20: #{tpu_custom_call.1} parent=1 // pred_region
      _
    $region21: #{tpu_custom_call.1} parent=1 // pred_fallthru
      _
    // Predicated region
    $region22: #{tpu_custom_call.1} parent=1 // pred_check
      _
    $region23: #{tpu_custom_call.1} parent=1 // pred_check_branch
      %24 = sbr.rel (0) target = $region25
    $region24: #{tpu_custom_call.1} parent=1 // pred_region
      _
    $region25: #{tpu_custom_call.1} parent=1 // pred_fallthru
      _
    // Predicated region
    $region26: #{tpu_custom_call.1} parent=1 // pred_check
      _
    $region27: #{tpu_custom_call.1} parent=1 // pred_check_branch
      %26 = sbr.rel (0) target = $region29
    $region28: #{tpu_custom_call.1} parent=1 // pred_region
      _
    $region29: #{tpu_custom_call.1} parent=1 // pred_fallthru
      _
    %v27 = vld [vmem:[%s1] sm:$0xff]
    %v28 = vld [vmem:[%s1 + $0x8] sm:$0xff]
    %v29 = vld [vmem:[%s1 + $0x10] sm:$0xff]
    %v30 = vld [vmem:[%s1 + $0x18] sm:$0xff]
    %v31 = vld [vmem:[%s0] sm:$0x1f]
    %v32 = vld [vmem:[%s2] sm:$0xff]
    %v33 = vld [vmem:[%s2 + $0x8] sm:$0xff]
    %v34 = vld [vmem:[%s2 + $0x10] sm:$0xff]
    %v35 = vld [vmem:[%s2 + $0x18] sm:$0xff]
    %37 = vset.pattern.permute.xlu0 0
    %38 = vperm.xlu0 %37, %v32
    %v39 = vpop.permute.xlu0 %38
    %42 = vset.pattern.permute.xlu0 0
    %43 = vperm.xlu0 %42, %v33
    %v44 = vpop.permute.xlu0 %43
    %47 = vset.pattern.permute.xlu0 0
    %48 = vperm.xlu0 %47, %v34
    %v49 = vpop.permute.xlu0 %48
    %52 = vset.pattern.permute.xlu0 0
    %53 = vperm.xlu0 %52, %v35
    %v54 = vpop.permute.xlu0 %53
    %vm56 = vcmask 39936
    %v58 = vsel %vm56, %v27, 0
    %v61 = vsel %vm56, %v28, 0
    %v64 = vsel %vm56, %v29, 0
    %v67 = vsel %vm56, %v30, 0
    %vm69 = vcmask 1044480
    %v71 = vsel %vm69, %v31, 0
    %73 = vmatprep.subr.mxu0 0.0
    %74 = vmatpush1.msra.mxu0 %v71
    %75 = vmatprep.subr.mxu0 0.0
    %76 = vmatpush1.msra.mxu0 0.0
    %77 = vmatprep.subr.mxu0 0.0
    %78 = vmatpush1.msra.mxu0 0.0
    %79 = vmatprep.subr.mxu0 0.0
    %80 = vmatpush1.msra.mxu0 0.0
    %81 = vmatprep.subr.mxu0 0.0
    %82 = vmatpush1.msra.mxu0 0.0
    %83 = vmatprep.subr.mxu0 0.0
    %84 = vmatpush1.msra.mxu0 0.0
    %85 = vmatprep.subr.mxu0 0.0
    %86 = vmatpush1.msra.mxu0 0.0
    %87 = vmatprep.subr.mxu0 0.0
    %88 = vmatpush1.msra.mxu0 0.0
    %89 = vmatprep.subr.mxu0 0.0
    %90 = vmatpush1.msra.mxu0 0.0
    %91 = vmatprep.subr.mxu0 0.0
    %92 = vmatpush1.msra.mxu0 0.0
    %93 = vmatprep.subr.mxu0 0.0
    %94 = vmatpush1.msra.mxu0 0.0
    %95 = vmatprep.subr.mxu0 0.0
    %96 = vmatpush1.msra.mxu0 0.0
    %97 = vmatprep.subr.mxu0 0.0
    %98 = vmatpush1.msra.mxu0 0.0
    %99 = vmatprep.subr.mxu0 0.0
    %100 = vmatpush1.msra.mxu0 0.0
    %101 = vmatprep.subr.mxu0 0.0
    %102 = vmatpush1.msra.mxu0 0.0
    %103 = vmatprep.subr.mxu0 0.0
    %104 = vmatpush1.msra.mxu0 0.0
    %105 = vmatprep.subr.mxu0 0.0
    %106 = vmatpush1.msra.mxu0 0.0
    %107 = vmatprep.subr.mxu0 0.0
    %108 = vmatpush1.msra.mxu0 0.0
    %109 = vmatprep.subr.mxu0 0.0
    %110 = vmatpush1.msra.mxu0 0.0
    %111 = vmatprep.subr.mxu0 0.0
    %112 = vmatpush1.msra.mxu0 0.0
    %113 = vmatprep.subr.mxu0 0.0
    %114 = vmatpush1.msra.mxu0 0.0
    %115 = vmatprep.subr.mxu0 0.0
    %116 = vmatpush1.msra.mxu0 0.0
    %117 = vmatprep.subr.mxu0 0.0
    %118 = vmatpush1.msra.mxu0 0.0
    %119 = vmatprep.subr.mxu0 0.0
    %120 = vmatpush1.msra.mxu0 0.0
    %121 = vmatprep.subr.mxu0 0.0
    %122 = vmatpush1.msra.mxu0 0.0
    %123 = vmatprep.subr.mxu0 0.0
    %124 = vmatpush1.msra.mxu0 0.0
    %125 = vmatprep.subr.mxu0 0.0
    %126 = vmatpush1.msra.mxu0 0.0
    %127 = vmatprep.subr.mxu0 0.0
    %128 = vmatpush1.msra.mxu0 0.0
    %129 = vmatprep.subr.mxu0 0.0
    %130 = vmatpush1.msra.mxu0 0.0
    %131 = vmatprep.subr.mxu0 0.0
    %132 = vmatpush1.msra.mxu0 0.0
    %133 = vmatprep.subr.mxu0 0.0
    %134 = vmatpush1.msra.mxu0 0.0
    %135 = vmatprep.subr.mxu0 0.0
    %136 = vmatpush1.msra.mxu0 0.0
    %137 = vmatprep.mubr.f32.mxu0 0.0
    %138 = vmatmul.mubr.f32.gmra.mrb[0].mxu0 %v58
    %v139 = vpop.f32.mrb[0].mxu0
    %v140 = vadd.f32 %v39, %v139
    %v141 = vpop.f32.mrb[0].mxu0
    %142 = vmatprep.mubr.f32.mxu0 0.0
    %143 = vmatmul.mubr.f32.gmra.mrb[0].mxu0 %v61
    %v144 = vpop.f32.mrb[0].mxu0
    %v145 = vadd.f32 %v44, %v144
    %v146 = vpop.f32.mrb[0].mxu0
    %147 = vmatprep.mubr.f32.mxu0 0.0
    %148 = vmatmul.mubr.f32.gmra.mrb[0].mxu0 %v64
    %v149 = vpop.f32.mrb[0].mxu0
    %v150 = vadd.f32 %v49, %v149
    %v151 = vpop.f32.mrb[0].mxu0
    %152 = vmatprep.mubr.f32.mxu0 0.0
    %153 = vmatmul.mubr.f32.gmra.mrb[0].mxu0 %v67
    %v154 = vpop.f32.mrb[0].mxu0
    %v155 = vadd.f32 %v54, %v154
    %v156 = vpop.f32.mrb[0].mxu0
    %157 = vdwg.mxu0
    %v158 = vmax.f32 %v140, 0.0
    %v159 = vmax.f32 %v145, 0.0
    %v160 = vmax.f32 %v150, 0.0
    %v161 = vmax.f32 %v155, 0.0
    %v162 = vld [vmem:[%s3] sm:$0xff]
    %v163 = vld [vmem:[%s3 + $0x8] sm:$0xff]
    %v164 = vld [vmem:[%s3 + $0x10] sm:$0xff]
    %v165 = vld [vmem:[%s3 + $0x18] sm:$0xff]
    %v166 = vld [vmem:[%s4] sm:$0xff]
    %v167 = vld [vmem:[%s4 + $0x8] sm:$0xff]
    %v168 = vld [vmem:[%s4 + $0x10] sm:$0xff]
    %v169 = vld [vmem:[%s4 + $0x18] sm:$0xff]
    %171 = vset.pattern.permute.xlu0 0
    %172 = vperm.xlu0 %171, %v166
    %v173 = vpop.permute.xlu0 %172
    %176 = vset.pattern.permute.xlu0 0
    %177 = vperm.xlu0 %176, %v167
    %v178 = vpop.permute.xlu0 %177
    %181 = vset.pattern.permute.xlu0 0
    %182 = vperm.xlu0 %181, %v168
    %v183 = vpop.permute.xlu0 %182
    %186 = vset.pattern.permute.xlu0 0
    %187 = vperm.xlu0 %186, %v169
    %v188 = vpop.permute.xlu0 %187
    %vm190 = vcmask 261120
    %v192 = vsel %vm190, %v162, 0
    %v195 = vsel %vm190, %v163, 0
    %v198 = vsel %vm190, %v164, 0
    %v201 = vsel %vm190, %v165, 0
    %203 = vmatprep.subr.mxu0 0.0
    %204 = vmatpush1.msra.mxu0 %v158
    %205 = vmatprep.subr.mxu0 0.0
    %206 = vmatpush1.msra.mxu0 %v159
    %207 = vmatprep.subr.mxu0 0.0
    %208 = vmatpush1.msra.mxu0 %v160
    %209 = vmatprep.subr.mxu0 0.0
    %210 = vmatpush1.msra.mxu0 %v161
    %211 = vmatprep.subr.mxu0 0.0
    %212 = vmatpush1.msra.mxu0 0.0
    %213 = vmatprep.subr.mxu0 0.0
    %214 = vmatpush1.msra.mxu0 0.0
    %215 = vmatprep.subr.mxu0 0.0
    %216 = vmatpush1.msra.mxu0 0.0
    %217 = vmatprep.subr.mxu0 0.0
    %218 = vmatpush1.msra.mxu0 0.0
    %219 = vmatprep.subr.mxu0 0.0
    %220 = vmatpush1.msra.mxu0 0.0
    %221 = vmatprep.subr.mxu0 0.0
    %222 = vmatpush1.msra.mxu0 0.0
    %223 = vmatprep.subr.mxu0 0.0
    %224 = vmatpush1.msra.mxu0 0.0
    %225 = vmatprep.subr.mxu0 0.0
    %226 = vmatpush1.msra.mxu0 0.0
    %227 = vmatprep.subr.mxu0 0.0
    %228 = vmatpush1.msra.mxu0 0.0
    %229 = vmatprep.subr.mxu0 0.0
    %230 = vmatpush1.msra.mxu0 0.0
    %231 = vmatprep.subr.mxu0 0.0
    %232 = vmatpush1.msra.mxu0 0.0
    %233 = vmatprep.subr.mxu0 0.0
    %234 = vmatpush1.msra.mxu0 0.0
    %235 = vmatprep.subr.mxu0 0.0
    %236 = vmatpush1.msra.mxu0 0.0
    %237 = vmatprep.subr.mxu0 0.0
    %238 = vmatpush1.msra.mxu0 0.0
    %239 = vmatprep.subr.mxu0 0.0
    %240 = vmatpush1.msra.mxu0 0.0
    %241 = vmatprep.subr.mxu0 0.0
    %242 = vmatpush1.msra.mxu0 0.0
    %243 = vmatprep.subr.mxu0 0.0
    %244 = vmatpush1.msra.mxu0 0.0
    %245 = vmatprep.subr.mxu0 0.0
    %246 = vmatpush1.msra.mxu0 0.0
    %247 = vmatprep.subr.mxu0 0.0
    %248 = vmatpush1.msra.mxu0 0.0
    %249 = vmatprep.subr.mxu0 0.0
    %250 = vmatpush1.msra.mxu0 0.0
    %251 = vmatprep.subr.mxu0 0.0
    %252 = vmatpush1.msra.mxu0 0.0
    %253 = vmatprep.subr.mxu0 0.0
    %254 = vmatpush1.msra.mxu0 0.0
    %255 = vmatprep.subr.mxu0 0.0
    %256 = vmatpush1.msra.mxu0 0.0
    %257 = vmatprep.subr.mxu0 0.0
    %258 = vmatpush1.msra.mxu0 0.0
    %259 = vmatprep.subr.mxu0 0.0
    %260 = vmatpush1.msra.mxu0 0.0
    %261 = vmatprep.subr.mxu0 0.0
    %262 = vmatpush1.msra.mxu0 0.0
    %263 = vmatprep.subr.mxu0 0.0
    %264 = vmatpush1.msra.mxu0 0.0
    %265 = vmatprep.subr.mxu0 0.0
    %266 = vmatpush1.msra.mxu0 0.0
    %267 = vmatprep.mubr.f32.mxu0 0.0
    %268 = vmatmul.mubr.f32.gmra.mrb[0].mxu0 %v192
    %v269 = vpop.f32.mrb[0].mxu0
    %v270 = vadd.f32 %v173, %v269
    %v271 = vpop.f32.mrb[0].mxu0
    %272 = vmatprep.mubr.f32.mxu0 0.0
    %273 = vmatmul.mubr.f32.gmra.mrb[0].mxu0 %v195
    %v274 = vpop.f32.mrb[0].mxu0
    %v275 = vadd.f32 %v178, %v274
    %v276 = vpop.f32.mrb[0].mxu0
    %277 = vmatprep.mubr.f32.mxu0 0.0
    %278 = vmatmul.mubr.f32.gmra.mrb[0].mxu0 %v198
    %v279 = vpop.f32.mrb[0].mxu0
    %v280 = vadd.f32 %v183, %v279
    %v281 = vpop.f32.mrb[0].mxu0
    %282 = vmatprep.mubr.f32.mxu0 0.0
    %283 = vmatmul.mubr.f32.gmra.mrb[0].mxu0 %v201
    %v284 = vpop.f32.mrb[0].mxu0
    %v285 = vadd.f32 %v188, %v284
    %v286 = vpop.f32.mrb[0].mxu0
    %287 = vdwg.mxu0
    %v288 = vmax.f32 %v270, 0.0
    %v289 = vmax.f32 %v275, 0.0
    %v290 = vmax.f32 %v280, 0.0
    %v291 = vmax.f32 %v285, 0.0
    %v292 = vld [vmem:[%s5] sm:$0x3]
    %v293 = vld [vmem:[%s6] sm:$0x3]
    %295 = vset.pattern.permute.xlu0 0
    %296 = vperm.xlu0 %295, %v293
    %v297 = vpop.permute.xlu0 %296
    %v300 = vsel %vm190, %v292, 0
    %302 = vmatprep.subr.mxu0 0.0
    %303 = vmatpush1.msra.mxu0 %v288
    %304 = vmatprep.subr.mxu0 0.0
    %305 = vmatpush1.msra.mxu0 %v289
    %306 = vmatprep.subr.mxu0 0.0
    %307 = vmatpush1.msra.mxu0 %v290
    %308 = vmatprep.subr.mxu0 0.0
    %309 = vmatpush1.msra.mxu0 %v291
    %310 = vmatprep.subr.mxu0 0.0
    %311 = vmatpush1.msra.mxu0 0.0
    %312 = vmatprep.subr.mxu0 0.0
    %313 = vmatpush1.msra.mxu0 0.0
    %314 = vmatprep.subr.mxu0 0.0
    %315 = vmatpush1.msra.mxu0 0.0
    %316 = vmatprep.subr.mxu0 0.0
    %317 = vmatpush1.msra.mxu0 0.0
    %318 = vmatprep.subr.mxu0 0.0
    %319 = vmatpush1.msra.mxu0 0.0
    %320 = vmatprep.subr.mxu0 0.0
    %321 = vmatpush1.msra.mxu0 0.0
    %322 = vmatprep.subr.mxu0 0.0
    %323 = vmatpush1.msra.mxu0 0.0
    %324 = vmatprep.subr.mxu0 0.0
    %325 = vmatpush1.msra.mxu0 0.0
    %326 = vmatprep.subr.mxu0 0.0
    %327 = vmatpush1.msra.mxu0 0.0
    %328 = vmatprep.subr.mxu0 0.0
    %329 = vmatpush1.msra.mxu0 0.0
    %330 = vmatprep.subr.mxu0 0.0
    %331 = vmatpush1.msra.mxu0 0.0
    %332 = vmatprep.subr.mxu0 0.0
    %333 = vmatpush1.msra.mxu0 0.0
    %334 = vmatprep.subr.mxu0 0.0
    %335 = vmatpush1.msra.mxu0 0.0
    %336 = vmatprep.subr.mxu0 0.0
    %337 = vmatpush1.msra.mxu0 0.0
    %338 = vmatprep.subr.mxu0 0.0
    %339 = vmatpush1.msra.mxu0 0.0
    %340 = vmatprep.subr.mxu0 0.0
    %341 = vmatpush1.msra.mxu0 0.0
    %342 = vmatprep.subr.mxu0 0.0
    %343 = vmatpush1.msra.mxu0 0.0
    %344 = vmatprep.subr.mxu0 0.0
    %345 = vmatpush1.msra.mxu0 0.0
    %346 = vmatprep.subr.mxu0 0.0
    %347 = vmatpush1.msra.mxu0 0.0
    %348 = vmatprep.subr.mxu0 0.0
    %349 = vmatpush1.msra.mxu0 0.0
    %350 = vmatprep.subr.mxu0 0.0
    %351 = vmatpush1.msra.mxu0 0.0
    %352 = vmatprep.subr.mxu0 0.0
    %353 = vmatpush1.msra.mxu0 0.0
    %354 = vmatprep.subr.mxu0 0.0
    %355 = vmatpush1.msra.mxu0 0.0
    %356 = vmatprep.subr.mxu0 0.0
    %357 = vmatpush1.msra.mxu0 0.0
    %358 = vmatprep.subr.mxu0 0.0
    %359 = vmatpush1.msra.mxu0 0.0
    %360 = vmatprep.subr.mxu0 0.0
    %361 = vmatpush1.msra.mxu0 0.0
    %362 = vmatprep.subr.mxu0 0.0
    %363 = vmatpush1.msra.mxu0 0.0
    %364 = vmatprep.subr.mxu0 0.0
    %365 = vmatpush1.msra.mxu0 0.0
    %366 = vmatprep.mubr.f32.mxu0 0.0
    %367 = vmatmul.mubr.f32.gmra.mrb[0].mxu0 %v300
    %v368 = vpop.f32.mrb[0].mxu0
    %v369 = vadd.f32 %v297, %v368
    %v370 = vpop.f32.mrb[0].mxu0
    %371 = vdwg.mxu0
    %v372 = vxor.u32 %v369, 2147483648
    %v373 = vmul.f32 %v372, 1.442695
    %v374 = vpow.pop %v373
    %v375 = vadd.f32 %v374, 1.0
    %v376 = vrcp.pop %v375
    %v377 = vmul.f32 1.0, %v376
    %vm378 = vcmask 58368
    %379 = vst.msk [vmem:[#allocation2] sm:$0x3] %vm378, %v377
    // Predicated region
    $region30: #{tpu_custom_call.1} parent=1 // pred_check
      _
    $region31: #{tpu_custom_call.1} parent=1 // pred_check_branch
      %381 = sbr.rel (0) target = $region33
    $region32: #{tpu_custom_call.1} parent=1 // pred_region
      %s383 = ssub.s32 32, 32
      %384 = vsyncadd [#allocation3], %s383
      %s386 = sshll.u32 [#allocation2], 4
      %s387 = int_to_ptr.vmem [resolvable:$true] %s386
      %389 = dma.vmem_to_hbm [thread:$0]  %s387, 32, %s7, [#allocation3]
    $region33: #{tpu_custom_call.1} parent=1 // pred_fallthru
      _
    // Predicated region
    $region34: #{tpu_custom_call.1} parent=1 // pred_check
      _
    $region35: #{tpu_custom_call.1} parent=1 // pred_check_branch
      %391 = sbr.rel (0) target = $region37
    $region36: #{tpu_custom_call.1} parent=1 // pred_region
      %392 = dma.done [#allocation3], 32
    $region37: #{tpu_custom_call.1} parent=1 // pred_fallthru
      _
    %393 = vsyncpa [#allocation3], 1

</llo_original>
